<compile_context>
chip_gen: v7x
topology: tpu7x:2x2x1
jax: 0.10.0
libtpu: 0.0.40
codegen_flags: <defaults>
</compile_context>

<pallas_src>
import functools

import jax
import jax.numpy as jnp
import numpy as np
from jax import lax
from jax.experimental import pallas as pl
from jax.experimental.pallas import tpu as pltpu

EPS = 1e-5  # nn.InstanceNorm2d default


def _vmem_capacity_bytes():
    """Physical VMEM per TensorCore (conservative fallback if query fails)."""
    try:
        info = pltpu.get_tpu_info()
        cap = getattr(info, "vmem_capacity_bytes", None)
        if cap:
            return int(cap)
    except Exception:
        pass
    return 64 << 20  # v7x per-core VMEM (the smallest of current gens)


def _pick_tile_hw(hw, per_col_bytes, budget_bytes):
    """Largest HW tile (multiple of 128, dividing hw) fitting the budget."""
    if hw * per_col_bytes <= budget_bytes:
        return hw
    cap = max(128, budget_bytes // max(per_col_bytes, 1))
    t = (min(cap, hw) // 128) * 128
    while t >= 128:
        if hw % t == 0:
            return t
        t -= 128
    return hw  # no multiple-of-128 divisor: whole image per step


# ---------------------------------------------------------------------------
# Fused single-pass kernel: stats + normalize + modulate + gate on a resident
# full-image block.  grid = (B,).
# ---------------------------------------------------------------------------
def _fused_kernel(h_ref, za_ref, gidbid_ref, wgb_ref, bgb_ref, wh_ref, bh_ref,
                  out_ref, *, c_x, hw, mxu_dtype):
    h = h_ref[0].astype(jnp.float32)                          # (c_x, HW)
    inv_n = jnp.float32(1.0 / hw)
    mu = jnp.sum(h, axis=-1, keepdims=True) * inv_n           # (c_x, 1)
    d = h - mu
    var = jnp.sum(d * d, axis=-1, keepdims=True) * inv_n      # centered (>= 0)
    hn = d * lax.rsqrt(var + jnp.float32(EPS))                # (c_x, HW)

    # fused 1x1 convs: gamma|beta = (2c_x, attr_c) @ (attr_c, HW), f32 acc
    gb = jnp.dot(wgb_ref[...], za_ref[0].astype(mxu_dtype),
                 preferred_element_type=jnp.float32) + bgb_ref[...]

    gidbid = gidbid_ref[0]                                    # (2c_x, 1) f32
    gid, bid = gidbid[:c_x], gidbid[c_x:]

    A = gb[:c_x] * hn + gb[c_x:]                              # attr branch
    I = gid * hn + bid                                        # id branch

    # mask: M = sigmoid((1, c_x) @ (c_x, HW)); hidden under HBM-bound DMA.
    m = jnp.dot(wh_ref[...], hn.astype(mxu_dtype),
                preferred_element_type=jnp.float32) + bh_ref[...]
    M = jax.nn.sigmoid(m)

    # (1 - M) * A + M * I  ==  A + M * (I - A)
    out_ref[0] = (A + M * (I - A)).astype(out_ref.dtype)


# ---------------------------------------------------------------------------
# Fallback pass 1: per-image, per-channel InstanceNorm stats, packed output
# (B, 2*c_x, 1) = [mean ; rstd].  grid = (B, HW // T_stats).
# ---------------------------------------------------------------------------
def _stats_kernel(h_ref, st_ref, *, hw, c_x):
    t = pl.program_id(1)

    @pl.when(t == 0)
    def _():
        st_ref[...] = jnp.zeros_like(st_ref)

    h = h_ref[0].astype(jnp.float32)                          # (c_x, T)
    s1 = jnp.sum(h, axis=-1, keepdims=True)                   # running sum
    s2 = jnp.sum(h * h, axis=-1, keepdims=True)               # running sumsq
    st_ref[0] += jnp.concatenate([s1, s2], axis=0)

    @pl.when(t == pl.num_programs(1) - 1)
    def _():
        st = st_ref[0]
        inv_n = jnp.float32(1.0 / hw)
        mu = st[:c_x] * inv_n
        var = jnp.maximum(st[c_x:] * inv_n - mu * mu, 0.0)    # clamp cancellation
        st_ref[0] = jnp.concatenate(
            [mu, lax.rsqrt(var + jnp.float32(EPS))], axis=0)


# ---------------------------------------------------------------------------
# Fallback pass 2: normalize + modulate + gate per spatial tile, packed side
# input (B, 4*c_x, 1) = [mean ; rstd ; gamma_id ; beta_id].
# ---------------------------------------------------------------------------
def _apply_kernel(h_ref, za_ref, side_ref, wgb_ref, bgb_ref, wh_ref, bh_ref,
                  out_ref, *, c_x, mxu_dtype):
    side = side_ref[0]                                        # (4c_x, 1) f32
    mu, rstd = side[:c_x], side[c_x:2 * c_x]
    gid, bid = side[2 * c_x:3 * c_x], side[3 * c_x:]

    hn = (h_ref[0].astype(jnp.float32) - mu) * rstd           # (c_x, T)

    gb = jnp.dot(wgb_ref[...], za_ref[0].astype(mxu_dtype),
                 preferred_element_type=jnp.float32) + bgb_ref[...]
    A = gb[:c_x] * hn + gb[c_x:]
    I = gid * hn + bid

    m = jnp.dot(wh_ref[...], hn.astype(mxu_dtype),
                preferred_element_type=jnp.float32) + bh_ref[...]
    M = jax.nn.sigmoid(m)

    out_ref[0] = (A + M * (I - A)).astype(out_ref.dtype)


def aad_layer_forward(h_in, z_attr, z_id, params, *, tile_hw=None,
                      mxu_dtype=jnp.bfloat16):
    """h_in: (B, c_x, H, W); z_attr: (B, attr_c, H, W); z_id: (B, c_id)."""
    B, c_x, H, W = h_in.shape
    attr_c = z_attr.shape[1]
    HW = H * W

    # Small-HW / large-c_x layers: the (c_x, HW) layout degenerates into
    # lane-sparse masked stores; plain XLA handles these tiny layers fine.
    if HW < 128:
        return reference_forward(h_in, z_attr, z_id, params)

    # Pure reshapes (no transposes): channels on sublanes, HW on lanes.
    h_l = h_in.reshape(B, c_x, HW)
    za_l = z_attr.reshape(B, attr_c, HW)

    # Hoisted z_id FC layers (M=1 matmuls -> plain XLA), packed per image.
    gid = (z_id @ params["wf1"] + params["bf1"]).astype(jnp.float32)
    bid = (z_id @ params["wf2"] + params["bf2"]).astype(jnp.float32)
    gidbid = jnp.concatenate(
        [gid.reshape(B, c_x, 1), bid.reshape(B, c_x, 1)], axis=1)  # (B, 2c_x, 1)

    # Fused gamma/beta 1x1-conv weights (MXU operands in mxu_dtype).
    wgb = jnp.concatenate([params["w1"], params["w2"]], axis=0).astype(mxu_dtype)
    bgb = jnp.concatenate([params["b1"], params["b2"]], axis=0).astype(jnp.float32)
    wh = params["wh"].astype(mxu_dtype)                       # (1, c_x)
    bh = params["bh"].astype(jnp.float32)                     # (1, 1)

    # ---- generation-aware VMEM budgets -----------------------------------
    cap = _vmem_capacity_bytes()
    vmem_limit = min(int(cap * 0.80), cap - (8 << 20))        # leave headroom
    itemsize = jnp.dtype(h_in.dtype).itemsize
    mxu_itemsize = jnp.dtype(mxu_dtype).itemsize
    # Resident weights/side blocks (x2: BlockSpec double-buffers by default).
    # TODO(synk): mark constant-index blocks pipeline_mode=pl.Buffered(1) once
    # verified on the target mosaic version; frees this 2x back into the tile.
    w_resident = 2 * (2 * c_x * attr_c * mxu_itemsize + 2 * c_x * 4
                      + c_x * mxu_itemsize + 4 + 4 * c_x * 4)
    # Per spatial column: double-buffered h/za/out blocks + live f32 temps
    # (h/hn, gb = 2*c_x rows, A, I, plus M/m rows).
    apply_per_col = 2 * (2 * c_x + attr_c) * itemsize + (7 * c_x + 2) * 4
    tile_budget = max(int(cap * 0.30) - w_resident, 2 << 20)

    use_fused = (HW * apply_per_col <= tile_budget) and (
        tile_hw is None or tile_hw == HW)

    if use_fused:
        # -------- single fused pass: h read from HBM exactly once ---------
        fullb = lambda a: pl.BlockSpec(a.shape, lambda b: (0, 0))
        out = pl.pallas_call(
            functools.partial(_fused_kernel, c_x=c_x, hw=HW, mxu_dtype=mxu_dtype),
            out_shape=jax.ShapeDtypeStruct((B, c_x, HW), h_in.dtype),
            grid_spec=pltpu.PrefetchScalarGridSpec(
                num_scalar_prefetch=0,
                grid=(B,),
                in_specs=[
                    pl.BlockSpec((1, c_x, HW), lambda b: (b, 0, 0)),     # h
                    pl.BlockSpec((1, attr_c, HW), lambda b: (b, 0, 0)),  # z_attr
                    pl.BlockSpec((1, 2 * c_x, 1), lambda b: (b, 0, 0)),  # gid|bid
                    fullb(wgb), fullb(bgb), fullb(wh), fullb(bh),
                ],
                out_specs=pl.BlockSpec((1, c_x, HW), lambda b: (b, 0, 0))),
            compiler_params=pltpu.CompilerParams(
                dimension_semantics=("parallel",),
                vmem_limit_bytes=vmem_limit),
        )(h_l, za_l, gidbid, wgb, bgb, wh, bh)
        return out.reshape(B, c_x, H, W)

    # -------- fallback: two-pass (stats + apply), tiled over HW -----------
    if tile_hw is not None:
        if HW % tile_hw != 0:
            raise ValueError(f"tile_hw={tile_hw} must divide H*W={HW}")
        if tile_hw != HW and tile_hw % 128 != 0:
            raise ValueError(f"tile_hw={tile_hw} must be a multiple of 128")
        T = tile_hw
    else:
        T = _pick_tile_hw(HW, apply_per_col, tile_budget)
    n_t = HW // T

    # Stats pass only streams h: give it its own, larger tile.
    stats_per_col = 2 * c_x * itemsize + 2 * c_x * 4
    T_s = _pick_tile_hw(HW, stats_per_col, int(cap * 0.45))
    n_ts = HW // T_s

    # pass 1: packed [mean ; rstd] per image, accumulated in resident output.
    # TODO(synk): on v7x with B==1, split the HW reduction into 2 "parallel"
    # partials so both TensorCores are used.
    stats = pl.pallas_call(
        functools.partial(_stats_kernel, hw=HW, c_x=c_x),
        out_shape=jax.ShapeDtypeStruct((B, 2 * c_x, 1), jnp.float32),
        grid_spec=pltpu.PrefetchScalarGridSpec(
            num_scalar_prefetch=0,
            grid=(B, n_ts),
            in_specs=[pl.BlockSpec((1, c_x, T_s), lambda b, t: (b, 0, t))],
            out_specs=pl.BlockSpec((1, 2 * c_x, 1), lambda b, t: (b, 0, 0))),
        compiler_params=pltpu.CompilerParams(
            dimension_semantics=("parallel", "arbitrary"),
            vmem_limit_bytes=vmem_limit),
    )(h_l)

    # pack all per-image side data into one block: 1 DMA instead of 4.
    side = jnp.concatenate([stats, gidbid], axis=1)           # (B, 4c_x, 1)

    full = lambda a: pl.BlockSpec(a.shape, lambda b, t: (0, 0))
    out = pl.pallas_call(
        functools.partial(_apply_kernel, c_x=c_x, mxu_dtype=mxu_dtype),
        out_shape=jax.ShapeDtypeStruct((B, c_x, HW), h_in.dtype),
        grid_spec=pltpu.PrefetchScalarGridSpec(
            num_scalar_prefetch=0,
            grid=(B, n_t),
            in_specs=[
                pl.BlockSpec((1, c_x, T), lambda b, t: (b, 0, t)),       # h
                pl.BlockSpec((1, attr_c, T), lambda b, t: (b, 0, t)),    # z_attr
                pl.BlockSpec((1, 4 * c_x, 1), lambda b, t: (b, 0, 0)),   # side
                full(wgb), full(bgb), full(wh), full(bh),
            ],
            out_specs=pl.BlockSpec((1, c_x, T), lambda b, t: (b, 0, t))),
        compiler_params=pltpu.CompilerParams(
            dimension_semantics=("parallel", "parallel"),
            vmem_limit_bytes=vmem_limit),
    )(h_l, za_l, side, wgb, bgb, wh, bh)

    return out.reshape(B, c_x, H, W)


# ---------------------------------------------------------------------------
# Pure-JAX reference (PyTorch module semantics, NCHW). Also the small-HW path.
# ---------------------------------------------------------------------------
def reference_forward(h_in, z_attr, z_id, params):
    mean = jnp.mean(h_in, axis=(2, 3), keepdims=True)
    var = jnp.mean((h_in - mean) ** 2, axis=(2, 3), keepdims=True)
    h = (h_in - mean) / jnp.sqrt(var + EPS)

    gamma_attr = jnp.einsum("bchw,dc->bdhw", z_attr, params["w1"]) \
        + params["b1"].reshape(1, -1, 1, 1)
    beta_attr = jnp.einsum("bchw,dc->bdhw", z_attr, params["w2"]) \
        + params["b2"].reshape(1, -1, 1, 1)
    A = gamma_attr * h + beta_attr

    gamma_id = z_id @ params["wf1"] + params["bf1"]
    beta_id = z_id @ params["wf2"] + params["bf2"]
    I = gamma_id[:, :, None, None] * h + beta_id[:, :, None, None]

    m = jnp.einsum("bchw,dc->bdhw", h, params["wh"]) \
        + params["bh"].reshape(1, -1, 1, 1)
    M = jax.nn.sigmoid(m)
    return (1.0 - M) * A + M * I


def init_params(key, c_x, attr_c, c_id):
    ks = jax.random.split(key, 10)
    f = jnp.float32
    return {
        # conv1 / conv2: 1x1 conv (attr_c -> c_x), stored as (c_x, attr_c)
        "w1": 0.2 * jax.random.normal(ks[0], (c_x, attr_c), f),
        "b1": 0.1 * jax.random.normal(ks[1], (c_x, 1), f),
        "w2": 0.2 * jax.random.normal(ks[2], (c_x, attr_c), f),
        "b2": 0.1 * jax.random.normal(ks[3], (c_x, 1), f),
        # fc1 / fc2: (c_id -> c_x), stored pre-transposed as (c_id, c_x)
        "wf1": 0.2 * jax.random.normal(ks[4], (c_id, c_x), f),
        "bf1": 0.1 * jax.random.normal(ks[5], (1, c_x), f),
        "wf2": 0.2 * jax.random.normal(ks[6], (c_id, c_x), f),
        "bf2": 0.1 * jax.random.normal(ks[7], (1, c_x), f),
        # conv_h: 1x1 conv (c_x -> 1), stored as (1, c_x)
        "wh": 0.2 * jax.random.normal(ks[8], (1, c_x), f),
        "bh": 0.1 * jax.random.normal(ks[9], (1, 1), f),
    }


if __name__ == "__main__":
    B, c_x, attr_c, c_id, H, W = 2, 4, 8, 32, 16, 16

    key = jax.random.PRNGKey(0)
    k_h, k_a, k_z, k_p = jax.random.split(key, 4)
    h_in = jax.random.normal(k_h, (B, c_x, H, W), jnp.float32)
    z_attr = jax.random.normal(k_a, (B, attr_c, H, W), jnp.float32)
    z_id = jax.random.normal(k_z, (B, c_id), jnp.float32)
    params = init_params(k_p, c_x, attr_c, c_id)

    ref = reference_forward(h_in, z_attr, z_id, params)

    # 1) fused single-pass path, exact (f32 MXU) math: tight check.
    out_exact = aad_layer_forward(h_in, z_attr, z_id, params,
                                  mxu_dtype=jnp.float32)
    out_exact = jax.block_until_ready(out_exact)
    np.testing.assert_allclose(np.asarray(out_exact), np.asarray(ref),
                               rtol=1e-4, atol=1e-4)

    # 2) default perf path (bf16 MXU operands, f32 accumulation): sanity check.
    out_fast = aad_layer_forward(h_in, z_attr, z_id, params)
    out_fast = jax.block_until_ready(out_fast)
    np.testing.assert_allclose(np.asarray(out_fast), np.asarray(ref),
                               rtol=1e-1, atol=1e-1)

    # 3) two-pass tiled fallback path (forced via tile_hw), exact math.
    out_tiled = aad_layer_forward(h_in, z_attr, z_id, params,
                                  tile_hw=128, mxu_dtype=jnp.float32)
    out_tiled = jax.block_until_ready(out_tiled)
    np.testing.assert_allclose(np.asarray(out_tiled), np.asarray(ref),
                               rtol=1e-4, atol=1e-4)

    print("KERNEL_OK")
</pallas_src>

<mosaic_0001>
module attributes {stable_mosaic.version = 11 : i64} {
  func.func @_fused_kernel(%arg0: i32, %arg1: memref<1x4x256xf32, #tpu.memory_space<vmem>>, %arg2: memref<1x8x256xf32, #tpu.memory_space<vmem>>, %arg3: memref<1x8x1xf32, #tpu.memory_space<vmem>>, %arg4: memref<8x8xf32, #tpu.memory_space<vmem>>, %arg5: memref<8x1xf32, #tpu.memory_space<vmem>>, %arg6: memref<1x4xf32, #tpu.memory_space<vmem>>, %arg7: memref<1x1xf32, #tpu.memory_space<vmem>>, %arg8: memref<1x4x256xf32, #tpu.memory_space<vmem>>) attributes {dimension_semantics = [#tpu.dimension_semantics<parallel>], iteration_bounds = array<i64: 2>, scalar_prefetch = 0 : i64, scratch_operands = 0 : i64, tpu.core_type = #tpu.core_type<tc>, window_params = [{transform_indices = @transform_0, window_bounds = array<i64: 1, 4, 256>}, {transform_indices = @transform_1, window_bounds = array<i64: 1, 8, 256>}, {transform_indices = @transform_2, window_bounds = array<i64: 1, 8, 1>}, {pipeline_mode = #tpu.pipeline_mode<synchronous>, transform_indices = @transform_3, window_bounds = array<i64: 8, 8>}, {pipeline_mode = #tpu.pipeline_mode<synchronous>, transform_indices = @transform_4, window_bounds = array<i64: 8, 1>}, {pipeline_mode = #tpu.pipeline_mode<synchronous>, transform_indices = @transform_5, window_bounds = array<i64: 1, 4>}, {pipeline_mode = #tpu.pipeline_mode<synchronous>, transform_indices = @transform_6, window_bounds = array<i64: 1, 1>}, {transform_indices = @transform_7, window_bounds = array<i64: 1, 4, 256>}]} {
    %c0 = arith.constant 0 : index
    %c0_0 = arith.constant 0 : index
    %c0_1 = arith.constant 0 : index
    %0 = vector.load %arg1[%c0, %c0_0, %c0_1] : memref<1x4x256xf32, #tpu.memory_space<vmem>>, vector<1x4x256xf32>
    %1 = vector.shape_cast %0 : vector<1x4x256xf32> to vector<4x256xf32>
    %cst = arith.constant dense<0.000000e+00> : vector<4xf32>
    %2 = vector.multi_reduction <add>, %1, %cst [1] : vector<4x256xf32> to vector<4xf32>
    %3 = vector.shape_cast %2 : vector<4xf32> to vector<4x1xf32>
    %cst_2 = arith.constant 3.906250e-03 : f32
    %4 = vector.broadcast %cst_2 : f32 to vector<4x1xf32>
    %5 = arith.mulf %3, %4 : vector<4x1xf32>
    %6 = vector.broadcast %5 : vector<4x1xf32> to vector<4x256xf32>
    %7 = arith.subf %1, %6 : vector<4x256xf32>
    %8 = arith.mulf %7, %7 : vector<4x256xf32>
    %cst_3 = arith.constant dense<0.000000e+00> : vector<4xf32>
    %9 = vector.multi_reduction <add>, %8, %cst_3 [1] : vector<4x256xf32> to vector<4xf32>
    %10 = vector.shape_cast %9 : vector<4xf32> to vector<4x1xf32>
    %cst_4 = arith.constant 3.906250e-03 : f32
    %11 = vector.broadcast %cst_4 : f32 to vector<4x1xf32>
    %12 = arith.mulf %10, %11 : vector<4x1xf32>
    %cst_5 = arith.constant 9.99999974E-6 : f32
    %13 = vector.broadcast %cst_5 : f32 to vector<4x1xf32>
    %14 = arith.addf %12, %13 : vector<4x1xf32>
    %15 = math.rsqrt %14 : vector<4x1xf32>
    %16 = vector.broadcast %15 : vector<4x1xf32> to vector<4x256xf32>
    %17 = arith.mulf %7, %16 : vector<4x256xf32>
    %c0_6 = arith.constant 0 : index
    %c0_7 = arith.constant 0 : index
    %18 = vector.load %arg4[%c0_6, %c0_7] : memref<8x8xf32, #tpu.memory_space<vmem>>, vector<8x8xf32>
    %c0_8 = arith.constant 0 : index
    %c0_9 = arith.constant 0 : index
    %c0_10 = arith.constant 0 : index
    %19 = vector.load %arg2[%c0_8, %c0_9, %c0_10] : memref<1x8x256xf32, #tpu.memory_space<vmem>>, vector<1x8x256xf32>
    %20 = vector.shape_cast %19 : vector<1x8x256xf32> to vector<8x256xf32>
    %cst_11 = arith.constant dense<0.000000e+00> : vector<8x256xf32>
    %21 = tpu.matmul %18, %20, %cst_11 {dimension_numbers = #tpu.dot_dimension_numbers<[1], [0], [0], [1], [0, 0, 1, 1], [], []>} : vector<8x8xf32>, vector<8x256xf32>, vector<8x256xf32> -> vector<8x256xf32>
    %c0_12 = arith.constant 0 : index
    %c0_13 = arith.constant 0 : index
    %22 = vector.load %arg5[%c0_12, %c0_13] : memref<8x1xf32, #tpu.memory_space<vmem>>, vector<8x1xf32>
    %23 = vector.broadcast %22 : vector<8x1xf32> to vector<8x256xf32>
    %24 = arith.addf %21, %23 : vector<8x256xf32>
    %c0_14 = arith.constant 0 : index
    %c0_15 = arith.constant 0 : index
    %c0_16 = arith.constant 0 : index
    %25 = vector.load %arg3[%c0_14, %c0_15, %c0_16] : memref<1x8x1xf32, #tpu.memory_space<vmem>>, vector<1x8x1xf32>
    %26 = vector.shape_cast %25 : vector<1x8x1xf32> to vector<8x1xf32>
    %27 = vector.extract_strided_slice %26 {offsets = [0, 0], sizes = [4, 1], strides = [1, 1]} : vector<8x1xf32> to vector<4x1xf32>
    %28 = vector.extract_strided_slice %26 {offsets = [4, 0], sizes = [4, 1], strides = [1, 1]} : vector<8x1xf32> to vector<4x1xf32>
    %29 = vector.extract_strided_slice %24 {offsets = [0, 0], sizes = [4, 256], strides = [1, 1]} : vector<8x256xf32> to vector<4x256xf32>
    %30 = arith.mulf %29, %17 : vector<4x256xf32>
    %31 = vector.extract_strided_slice %24 {offsets = [4, 0], sizes = [4, 256], strides = [1, 1]} : vector<8x256xf32> to vector<4x256xf32>
    %32 = arith.addf %30, %31 : vector<4x256xf32>
    %33 = vector.broadcast %27 : vector<4x1xf32> to vector<4x256xf32>
    %34 = arith.mulf %33, %17 : vector<4x256xf32>
    %35 = vector.broadcast %28 : vector<4x1xf32> to vector<4x256xf32>
    %36 = arith.addf %34, %35 : vector<4x256xf32>
    %c0_17 = arith.constant 0 : index
    %c0_18 = arith.constant 0 : index
    %37 = vector.load %arg6[%c0_17, %c0_18] : memref<1x4xf32, #tpu.memory_space<vmem>>, vector<1x4xf32>
    %cst_19 = arith.constant dense<0.000000e+00> : vector<1x256xf32>
    %38 = tpu.matmul %37, %17, %cst_19 {dimension_numbers = #tpu.dot_dimension_numbers<[1], [0], [0], [1], [0, 0, 1, 1], [], []>} : vector<1x4xf32>, vector<4x256xf32>, vector<1x256xf32> -> vector<1x256xf32>
    %c0_20 = arith.constant 0 : index
    %c0_21 = arith.constant 0 : index
    %39 = vector.load %arg7[%c0_20, %c0_21] : memref<1x1xf32, #tpu.memory_space<vmem>>, vector<1x1xf32>
    %40 = vector.broadcast %39 : vector<1x1xf32> to vector<1x256xf32>
    %41 = arith.addf %38, %40 : vector<1x256xf32>
    %42 = arith.negf %41 : vector<1x256xf32>
    %43 = math.exp %42 : vector<1x256xf32>
    %cst_22 = arith.constant 1.000000e+00 : f32
    %44 = vector.broadcast %cst_22 : f32 to vector<1x256xf32>
    %45 = arith.addf %44, %43 : vector<1x256xf32>
    %46 = arith.divf %44, %45 : vector<1x256xf32>
    %47 = arith.subf %36, %32 : vector<4x256xf32>
    %48 = vector.broadcast %46 : vector<1x256xf32> to vector<4x256xf32>
    %49 = arith.mulf %48, %47 : vector<4x256xf32>
    %50 = arith.addf %32, %49 : vector<4x256xf32>
    %c0_23 = arith.constant 0 : index
    %c0_24 = arith.constant 0 : index
    %c0_25 = arith.constant 0 : index
    %51 = vector.load %arg8[%c0_23, %c0_24, %c0_25] : memref<1x4x256xf32, #tpu.memory_space<vmem>>, vector<1x4x256xf32>
    %52 = vector.shape_cast %51 : vector<1x4x256xf32> to vector<4x256xf32>
    %53 = vector.shape_cast %50 : vector<4x256xf32> to vector<1x4x256xf32>
    tpu.vector_store %arg8[%c0_23, %c0_24, %c0_25], %53 {strides = array<i32>} : memref<1x4x256xf32, #tpu.memory_space<vmem>>, vector<1x4x256xf32>,
    return
  }
  func.func @transform_0(%arg0: i32) -> (i32, i32, i32) {
    %c0_i32 = arith.constant 0 : i32
    %c0_i32_0 = arith.constant 0 : i32
    %c0_i32_1 = arith.constant 0 : i32
    return %arg0, %c0_i32, %c0_i32_0 : i32, i32, i32
  }
  func.func @transform_1(%arg0: i32) -> (i32, i32, i32) {
    %c0_i32 = arith.constant 0 : i32
    %c0_i32_0 = arith.constant 0 : i32
    %c0_i32_1 = arith.constant 0 : i32
    return %arg0, %c0_i32, %c0_i32_0 : i32, i32, i32
  }
  func.func @transform_2(%arg0: i32) -> (i32, i32, i32) {
    %c0_i32 = arith.constant 0 : i32
    %c0_i32_0 = arith.constant 0 : i32
    %c0_i32_1 = arith.constant 0 : i32
    return %arg0, %c0_i32, %c0_i32_0 : i32, i32, i32
  }
  func.func @transform_3(%arg0: i32) -> (i32, i32) {
    %c0_i32 = arith.constant 0 : i32
    %c0_i32_0 = arith.constant 0 : i32
    %c0_i32_1 = arith.constant 0 : i32
    return %c0_i32, %c0_i32_0 : i32, i32
  }
  func.func @transform_4(%arg0: i32) -> (i32, i32) {
    %c0_i32 = arith.constant 0 : i32
    %c0_i32_0 = arith.constant 0 : i32
    %c0_i32_1 = arith.constant 0 : i32
    return %c0_i32, %c0_i32_0 : i32, i32
  }
  func.func @transform_5(%arg0: i32) -> (i32, i32) {
    %c0_i32 = arith.constant 0 : i32
    %c0_i32_0 = arith.constant 0 : i32
    %c0_i32_1 = arith.constant 0 : i32
    return %c0_i32, %c0_i32_0 : i32, i32
  }
  func.func @transform_6(%arg0: i32) -> (i32, i32) {
    %c0_i32 = arith.constant 0 : i32
    %c0_i32_0 = arith.constant 0 : i32
    %c0_i32_1 = arith.constant 0 : i32
    return %c0_i32, %c0_i32_0 : i32, i32
  }
  func.func @transform_7(%arg0: i32) -> (i32, i32, i32) {
    %c0_i32 = arith.constant 0 : i32
    %c0_i32_0 = arith.constant 0 : i32
    %c0_i32_1 = arith.constant 0 : i32
    return %arg0, %c0_i32, %c0_i32_0 : i32, i32, i32
  }
}

</mosaic_0001>

<llo_original>
// kernel: tpu_custom_call.1
$region0: #{tpu_custom_call.1}
  #allocation0 [shape = 'u32[]', space=smem, size = 0x4, offset = 0x4, fixed_abs, tag = 'smem constant byte address 0x4 - core index']
  #allocation1 [shape = 'u32[144,128]{1,0:T(1,128)}', space=vmem, size = 0x12000, scoped, tag = 'internal scratch']
  #allocation2 [shape = 'f32[1,1]{1,0:T(1,128)S(1)}', space=vmem, size = 0x200, scoped, tag = 'scoped memory for tpu_custom_call.1']
  %s0 = inlined_call_operand.hbm [shape: f32[2,4,256], index: 0, kind: input, shape index: {}]
  %s1 = inlined_call_operand.vmem [shape: f32[2,8,256], index: 1, kind: input, shape index: {}]
  %s2 = inlined_call_operand.vmem [shape: f32[2,8,1], index: 2, kind: input, shape index: {}]
  %s3 = inlined_call_operand.vmem [shape: f32[8,8], index: 3, kind: input, shape index: {}]
  %s4 = inlined_call_operand.vmem [shape: f32[8,1], index: 4, kind: input, shape index: {}]
  %s5 = inlined_call_operand.vmem [shape: f32[1,4], index: 5, kind: input, shape index: {}]
  %s6 = inlined_call_operand.<no memory space> [shape: f32[1,1], index: 6, kind: input, shape index: {}]
  %s7 = inlined_call_operand.hbm [shape: f32[2,4,256], index: 7, kind: output, shape index: {}]
  %s8 = sld [smem:[#allocation0]]
  $region65: #{tpu_custom_call.1} parent=0
    _
  %s10 = ssub.s32 1, %s8
  %s11 = scalar_select 0, %s10, %s8
  %v12 = vstv %s6
  %13 = vst [vmem:[#allocation2] sm:$0x1] %v12
  $region1: #{tpu_custom_call.1} parent=0
    #allocation3 [shape = 'u8[8192]{0}', space=vmem, size = 0x2000, scoped, tag = 'input window, operand 0']
    #allocation4 [shape = 's32[2]{0}', space=sflag, size = 0x8, scoped, tag = 'scoped memory for tpu_custom_call.1']
    #allocation5 [shape = 's32[2]{0}', space=sflag, size = 0x8, scoped, tag = 'scoped memory for tpu_custom_call.1']
    #allocation6 [shape = 'u8[8192]{0}', space=vmem, size = 0x2000, scoped, tag = 'output window, operand 0']
    %14 = vsyncpa [#allocation4], 0
    %s15 = scalar_lea.sflag [#allocation4], 1
    %16 = vsyncpa %s15, 0
    %17 = vsyncpa [#allocation5], 0
    %s18 = scalar_lea.sflag [#allocation5], 1
    %19 = vsyncpa %s18, 0
    loop: start=0, step=1, limit=4
    $region2: #{tpu_custom_call.1} parent=1 // loop_pre_header
      _
    $region3: #{tpu_custom_call.1} parent=1 // loop_header
      %s21 = sphi 0, %s25
      %p22 = scmp.ge.s32.totalorder %s21, 4
      %s31 = sphi 0, %s33
      %s34 = sphi 0, %s31
      %s35 = sphi 0, %s34
      %s51 = sphi 0, %s35
      %s57 = sphi 0, %s59
      %s60 = sphi 0, %s57
      %s61 = sphi 0, %s60
      %s77 = sphi 0, %s61
      %s83 = sphi 0, %s85
      %s86 = sphi 0, %s83
      %s87 = sphi 0, %s86
      %s103 = sphi 0, %s87
      %s107 = sphi 0, %s107
      %s109 = sphi 0, %s107
      %s110 = sphi 0, %s109
      %s124 = sphi 0, %s110
      %s128 = sphi 0, %s128
      %s130 = sphi 0, %s128
      %s131 = sphi 0, %s130
      %s145 = sphi 0, %s131
      %s149 = sphi 0, %s149
      %s151 = sphi 0, %s149
      %s152 = sphi 0, %s151
      %s166 = sphi 0, %s152
      %s170 = sphi 0, %s170
      %s172 = sphi 0, %s170
      %s173 = sphi 0, %s172
      %s187 = sphi 0, %s173
      %s193 = sphi 0, %s195
      %s196 = sphi 0, %s193
      %s197 = sphi 0, %s196
      %s213 = sphi 0, %s197
    $region4: #{tpu_custom_call.1} parent=1 // loop_header_branch
      %24 = sbr.rel (%p22) target = $region8
    $region5: #{tpu_custom_call.1} parent=1 // loop_body
      %s26 = ssub.s32 %s21, 1
      %s27 = ssub.s32 %s21, 2
      %s28 = sadd.s32 %s21, 1
      %s29 = ssub.s32 %s21, %s28
      %p30 = scmp.eq.s32.totalorder %s29, 0
      %s32 = sadd.s32 %s31, 1
      %s33 = scalar_select %p30, %s31, %s32
      %p36 = pneg %p30
      %p37 = scmp.eq.s32.totalorder %s21, 1
      %p38 = por %p36, %p37
      %p39 = scmp.ne.s32.totalorder %s31, %s34
      %p40 = scmp.eq.s32.totalorder %s21, 0
      %p41 = por %p39, %p40
      %p42 = scmp.ne.s32.totalorder %s31, %s34
      %p43 = scmp.eq.s32.totalorder %s26, 1
      %p44 = por %p42, %p43
      %p45 = scmp.ne.s32.totalorder %s34, %s35
      %p46 = scmp.eq.s32.totalorder %s26, 0
      %p47 = por %p45, %p46
      %p48 = scmp.ne.s32.totalorder %s34, %s35
      %p49 = scmp.eq.s32.totalorder %s27, 1
      %p50 = por %p48, %p49
      %p52 = scmp.ne.s32.totalorder %s35, %s51
      %p53 = scmp.eq.s32.totalorder %s27, 0
      %p54 = por %p52, %p53
      %s55 = ssub.s32 %s21, %s28
      %p56 = scmp.eq.s32.totalorder %s55, 0
      %s58 = sadd.s32 %s57, 1
      %s59 = scalar_select %p56, %s57, %s58
      %p62 = pneg %p56
      %p63 = scmp.eq.s32.totalorder %s21, 1
      %p64 = por %p62, %p63
      %p65 = scmp.ne.s32.totalorder %s57, %s60
      %p66 = scmp.eq.s32.totalorder %s21, 0
      %p67 = por %p65, %p66
      %p68 = scmp.ne.s32.totalorder %s57, %s60
      %p69 = scmp.eq.s32.totalorder %s26, 1
      %p70 = por %p68, %p69
      %p71 = scmp.ne.s32.totalorder %s60, %s61
      %p72 = scmp.eq.s32.totalorder %s26, 0
      %p73 = por %p71, %p72
      %p74 = scmp.ne.s32.totalorder %s60, %s61
      %p75 = scmp.eq.s32.totalorder %s27, 1
      %p76 = por %p74, %p75
      %p78 = scmp.ne.s32.totalorder %s61, %s77
      %p79 = scmp.eq.s32.totalorder %s27, 0
      %p80 = por %p78, %p79
      %s81 = ssub.s32 %s21, %s28
      %p82 = scmp.eq.s32.totalorder %s81, 0
      %s84 = sadd.s32 %s83, 1
      %s85 = scalar_select %p82, %s83, %s84
      %p88 = pneg %p82
      %p89 = scmp.eq.s32.totalorder %s21, 1
      %p90 = por %p88, %p89
      %p91 = scmp.ne.s32.totalorder %s83, %s86
      %p92 = scmp.eq.s32.totalorder %s21, 0
      %p93 = por %p91, %p92
      %p94 = scmp.ne.s32.totalorder %s83, %s86
      %p95 = scmp.eq.s32.totalorder %s26, 1
      %p96 = por %p94, %p95
      %p97 = scmp.ne.s32.totalorder %s86, %s87
      %p98 = scmp.eq.s32.totalorder %s26, 0
      %p99 = por %p97, %p98
      %p100 = scmp.ne.s32.totalorder %s86, %s87
      %p101 = scmp.eq.s32.totalorder %s27, 1
      %p102 = por %p100, %p101
      %p104 = scmp.ne.s32.totalorder %s87, %s103
      %p105 = scmp.eq.s32.totalorder %s27, 0
      %p106 = por %p104, %p105
      %s108 = sadd.s32 %s107, 1
      %p111 = scmp.eq.s32.totalorder %s21, 1
      %p112 = scmp.ne.s32.totalorder %s107, %s109
      %p113 = scmp.eq.s32.totalorder %s21, 0
      %p114 = por %p112, %p113
      %p115 = scmp.ne.s32.totalorder %s107, %s109
      %p116 = scmp.eq.s32.totalorder %s26, 1
      %p117 = por %p115, %p116
      %p118 = scmp.ne.s32.totalorder %s109, %s110
      %p119 = scmp.eq.s32.totalorder %s26, 0
      %p120 = por %p118, %p119
      %p121 = scmp.ne.s32.totalorder %s109, %s110
      %p122 = scmp.eq.s32.totalorder %s27, 1
      %p123 = por %p121, %p122
      %p125 = scmp.ne.s32.totalorder %s110, %s124
      %p126 = scmp.eq.s32.totalorder %s27, 0
      %p127 = por %p125, %p126
      %s129 = sadd.s32 %s128, 1
      %p132 = scmp.eq.s32.totalorder %s21, 1
      %p133 = scmp.ne.s32.totalorder %s128, %s130
      %p134 = scmp.eq.s32.totalorder %s21, 0
      %p135 = por %p133, %p134
      %p136 = scmp.ne.s32.totalorder %s128, %s130
      %p137 = scmp.eq.s32.totalorder %s26, 1
      %p138 = por %p136, %p137
      %p139 = scmp.ne.s32.totalorder %s130, %s131
      %p140 = scmp.eq.s32.totalorder %s26, 0
      %p141 = por %p139, %p140
      %p142 = scmp.ne.s32.totalorder %s130, %s131
      %p143 = scmp.eq.s32.totalorder %s27, 1
      %p144 = por %p142, %p143
      %p146 = scmp.ne.s32.totalorder %s131, %s145
      %p147 = scmp.eq.s32.totalorder %s27, 0
      %p148 = por %p146, %p147
      %s150 = sadd.s32 %s149, 1
      %p153 = scmp.eq.s32.totalorder %s21, 1
      %p154 = scmp.ne.s32.totalorder %s149, %s151
      %p155 = scmp.eq.s32.totalorder %s21, 0
      %p156 = por %p154, %p155
      %p157 = scmp.ne.s32.totalorder %s149, %s151
      %p158 = scmp.eq.s32.totalorder %s26, 1
      %p159 = por %p157, %p158
      %p160 = scmp.ne.s32.totalorder %s151, %s152
      %p161 = scmp.eq.s32.totalorder %s26, 0
      %p162 = por %p160, %p161
      %p163 = scmp.ne.s32.totalorder %s151, %s152
      %p164 = scmp.eq.s32.totalorder %s27, 1
      %p165 = por %p163, %p164
      %p167 = scmp.ne.s32.totalorder %s152, %s166
      %p168 = scmp.eq.s32.totalorder %s27, 0
      %p169 = por %p167, %p168
      %s171 = sadd.s32 %s170, 1
      %p174 = scmp.eq.s32.totalorder %s21, 1
      %p175 = scmp.ne.s32.totalorder %s170, %s172
      %p176 = scmp.eq.s32.totalorder %s21, 0
      %p177 = por %p175, %p176
      %p178 = scmp.ne.s32.totalorder %s170, %s172
      %p179 = scmp.eq.s32.totalorder %s26, 1
      %p180 = por %p178, %p179
      %p181 = scmp.ne.s32.totalorder %s172, %s173
      %p182 = scmp.eq.s32.totalorder %s26, 0
      %p183 = por %p181, %p182
      %p184 = scmp.ne.s32.totalorder %s172, %s173
      %p185 = scmp.eq.s32.totalorder %s27, 1
      %p186 = por %p184, %p185
      %p188 = scmp.ne.s32.totalorder %s173, %s187
      %p189 = scmp.eq.s32.totalorder %s27, 0
      %p190 = por %p188, %p189
      %s191 = ssub.s32 %s21, %s28
      %p192 = scmp.eq.s32.totalorder %s191, 0
      %s194 = sadd.s32 %s193, 1
      %s195 = scalar_select %p192, %s193, %s194
      %p198 = pneg %p192
      %p199 = scmp.eq.s32.totalorder %s21, 1
      %p200 = por %p198, %p199
      %p201 = scmp.ne.s32.totalorder %s193, %s196
      %p202 = scmp.eq.s32.totalorder %s21, 0
      %p203 = por %p201, %p202
      %p204 = scmp.ne.s32.totalorder %s193, %s196
      %p205 = scmp.eq.s32.totalorder %s26, 1
      %p206 = por %p204, %p205
      %p207 = scmp.ne.s32.totalorder %s196, %s197
      %p208 = scmp.eq.s32.totalorder %s26, 0
      %p209 = por %p207, %p208
      %p210 = scmp.ne.s32.totalorder %s196, %s197
      %p211 = scmp.eq.s32.totalorder %s27, 1
      %p212 = por %p210, %p211
      %p214 = scmp.ne.s32.totalorder %s197, %s213
      %p215 = scmp.eq.s32.totalorder %s27, 0
      %p216 = por %p214, %p215
      %p217 = scmp.le.s32.totalorder 1, %s21
      %p218 = scmp.lt.s32.totalorder %s21, 3
      %p219 = pnand %p217, %p218
      %p220 = pneg %p219
      // Predicated region
      $region9: #{tpu_custom_call.1} parent=5 // pred_check
        _
      $region10: #{tpu_custom_call.1} parent=5 // pred_check_branch
        %222 = sbr.rel (%p219) target = $region12
      $region11: #{tpu_custom_call.1} parent=5 // pred_region
        %s223 = ssub.s32 %s21, 1
        // Predicated region
        $region13: #{tpu_custom_call.1} parent=11 // pred_check
          %p224 = pneg %p120
        $region14: #{tpu_custom_call.1} parent=11 // pred_check_branch
          %226 = sbr.rel (%p224) target = $region16
        $region15: #{tpu_custom_call.1} parent=11 // pred_region
          _
        $region16: #{tpu_custom_call.1} parent=11 // pred_fallthru
          _
        // Predicated region
        $region17: #{tpu_custom_call.1} parent=11 // pred_check
          %p227 = pneg %p141
        $region18: #{tpu_custom_call.1} parent=11 // pred_check_branch
          %229 = sbr.rel (%p227) target = $region20
        $region19: #{tpu_custom_call.1} parent=11 // pred_region
          _
        $region20: #{tpu_custom_call.1} parent=11 // pred_fallthru
          _
        // Predicated region
        $region21: #{tpu_custom_call.1} parent=11 // pred_check
          %p230 = pneg %p162
        $region22: #{tpu_custom_call.1} parent=11 // pred_check_branch
          %232 = sbr.rel (%p230) target = $region24
        $region23: #{tpu_custom_call.1} parent=11 // pred_region
          _
        $region24: #{tpu_custom_call.1} parent=11 // pred_fallthru
          _
        // Predicated region
        $region25: #{tpu_custom_call.1} parent=11 // pred_check
          %p233 = pneg %p183
        $region26: #{tpu_custom_call.1} parent=11 // pred_check_branch
          %235 = sbr.rel (%p233) target = $region28
        $region27: #{tpu_custom_call.1} parent=11 // pred_region
          _
        $region28: #{tpu_custom_call.1} parent=11 // pred_fallthru
          _
      $region12: #{tpu_custom_call.1} parent=5 // pred_fallthru
        _
      %p236 = scmp.lt.s32.totalorder %s21, 2
      // Predicated region
      $region29: #{tpu_custom_call.1} parent=5 // pred_check
        %p237 = pneg %p236
      $region30: #{tpu_custom_call.1} parent=5 // pred_check_branch
        %239 = sbr.rel (%p237) target = $region32
      $region31: #{tpu_custom_call.1} parent=5 // pred_region
        // Predicated region
        $region33: #{tpu_custom_call.1} parent=31 // pred_check
          %p240 = pneg %p41
        $region34: #{tpu_custom_call.1} parent=31 // pred_check_branch
          %242 = sbr.rel (%p240) target = $region36
        $region35: #{tpu_custom_call.1} parent=31 // pred_region
          %s243 = sand.u32 %s31, 1
          %s244 = scalar_lea.sflag [#allocation4], %s243
          %s245 = sand.u32 %s31, 1
          %s246 = smul.addr %s245, 8
          %s247 = scalar_lea.vmem [#allocation3], %s246
          %s249 = ssub.s32 128, 128
          %250 = vsyncadd %s244, %s249
          %s251 = smul.addr %s21, 2
          %s252 = smul.addr %s251, 64
          %s253 = scalar_lea.hbm %s0, %s252
          %s255 = sshll.u32 %s247, 4
          %s256 = int_to_ptr.vmem [resolvable:$true] %s255
          %258 = dma.hbm_to_vmem [thread:$0]  %s253, 128, %s256, %s244
        $region36: #{tpu_custom_call.1} parent=31 // pred_fallthru
          _
        // Predicated region
        $region37: #{tpu_custom_call.1} parent=31 // pred_check
          %p259 = pneg %p67
        $region38: #{tpu_custom_call.1} parent=31 // pred_check_branch
          %261 = sbr.rel (%p259) target = $region40
        $region39: #{tpu_custom_call.1} parent=31 // pred_region
          %p262 = scmp.lt.s32.totalorder %s21, 1
          %s263 = scalar_select %p262, %s21, 1
          %s264 = smul.addr %s263, 2
          %s265 = smul.addr %s264, 8
          %s266 = scalar_lea.vmem %s1, %s265
        $region40: #{tpu_custom_call.1} parent=31 // pred_fallthru
          _
        // Predicated region
        $region41: #{tpu_custom_call.1} parent=31 // pred_check
          %p267 = pneg %p93
        $region42: #{tpu_custom_call.1} parent=31 // pred_check_branch
          %269 = sbr.rel (%p267) target = $region44
        $region43: #{tpu_custom_call.1} parent=31 // pred_region
          %p270 = scmp.lt.s32.totalorder %s21, 1
          %s271 = scalar_select %p270, %s21, 1
          %s272 = smul.addr %s271, 8
          %s273 = scalar_lea.vmem %s2, %s272
        $region44: #{tpu_custom_call.1} parent=31 // pred_fallthru
          _
      $region32: #{tpu_custom_call.1} parent=5 // pred_fallthru
        _
      %p274 = scmp.le.s32.totalorder 1, %s21
      %p275 = scmp.lt.s32.totalorder %s21, 3
      %p276 = pnand %p274, %p275
      %p277 = pneg %p276
      // Predicated region
      $region45: #{tpu_custom_call.1} parent=5 // pred_check
        _
      $region46: #{tpu_custom_call.1} parent=5 // pred_check_branch
        %279 = sbr.rel (%p276) target = $region48
      $region47: #{tpu_custom_call.1} parent=5 // pred_region
        %s280 = ssub.s32 %s21, 1
        %s281 = sand.u32 %s34, 1
        %s282 = scalar_lea.sflag [#allocation4], %s281
        %s283 = sand.u32 %s34, 1
        %s284 = smul.addr %s283, 8
        %s285 = scalar_lea.vmem [#allocation3], %s284
        // Predicated region
        $region49: #{tpu_custom_call.1} parent=47 // pred_check
          %p286 = pneg %p47
        $region50: #{tpu_custom_call.1} parent=47 // pred_check_branch
          %288 = sbr.rel (%p286) target = $region52
        $region51: #{tpu_custom_call.1} parent=47 // pred_region
          %289 = dma.done %s282, 128
        $region52: #{tpu_custom_call.1} parent=47 // pred_fallthru
          _
        %s290 = sand.u32 %s34, 1
        %s291 = scalar_lea.sflag [#allocation4], %s290
        %s292 = sand.u32 %s34, 1
        %s293 = smul.addr %s292, 8
        %s294 = scalar_lea.vmem [#allocation3], %s293
        %p295 = pneg %p47
        %p296 = pneg %p44
        %p297 = scmp.lt.s32.totalorder %s26, 1
        %s298 = scalar_select %p297, %s26, 1
        %s299 = smul.addr %s298, 2
        %s300 = smul.addr %s299, 8
        %s301 = scalar_lea.vmem %s1, %s300
        %p302 = pneg %p73
        %p303 = pneg %p70
        %p304 = scmp.lt.s32.totalorder %s26, 1
        %s305 = scalar_select %p304, %s26, 1
        %s306 = smul.addr %s305, 8
        %s307 = scalar_lea.vmem %s2, %s306
        %p308 = pneg %p99
        %p309 = pneg %p96
        %p310 = pneg %p120
        %p311 = pneg %p117
        %p312 = pneg %p141
        %p313 = pneg %p138
        %p314 = pneg %p162
        %p315 = pneg %p159
        %p316 = pneg %p183
        %p317 = pneg %p180
        %p318 = pneg %p209
        %p319 = pneg %p206
        %s320 = sand.u32 %s196, 1
        %s321 = scalar_lea.sflag [#allocation5], %s320
        %s322 = sand.u32 %s196, 1
        %s323 = smul.addr %s322, 8
        %s324 = scalar_lea.vmem [#allocation6], %s323
        %p325 = scmp.lt.s32.totalorder %s26, 1
        %s326 = scalar_select %p325, %s26, 1
        %s327 = smul.addr %s326, 2
        %s328 = smul.addr %s327, 8
        %s329 = scalar_lea.vmem %s1, %s328
        %p330 = scmp.lt.s32.totalorder %s26, 1
        %s331 = scalar_select %p330, %s26, 1
        %s332 = smul.addr %s331, 8
        %s333 = scalar_lea.vmem %s2, %s332
        %v334 = vld [vmem:[%s285] sm:$0xff]
        %v336 = vcombine.high %v334, %v334
        %vm338 = vcmask 1043456
        %v339 = vsel %vm338, %v334, 0.0
        %v340 = vsel %vm338, %v336, 0.0
        %v341 = vadd.f32 %v339, %v340
        %342 = vadd.xlane.f32.xlu0 %v341
        %v343 = vpop.xlane.xlu0 %342
        %v344 = vmul.f32 %v343, 0.00390625
        %v347 = vunpack.c.l.s4 839922192
        %v348 = vunpack.c.0.s8 %v347
        %v349 = vlaneseq
        %v350 = vshrl.u32 %v349, 7
        %v351 = vsub.s32 %v348, %v350
        %v352 = vrot.slane %v344, %v351
        %v354 = vsub.f32 %v334, %v352
        %v355 = vmul.f32 %v354, %v354
        %v357 = vcombine.high %v355, %v355
        %v359 = vsel %vm338, %v355, 0.0
        %v360 = vsel %vm338, %v357, 0.0
        %v361 = vadd.f32 %v359, %v360
        %362 = vadd.xlane.f32.xlu0 %v361
        %v363 = vpop.xlane.xlu0 %362
        %v364 = vmul.f32 %v363, 0.00390625
        %v365 = vadd.f32 %v364, 1e-05
        %v366 = vrsqrt.pop %v365
        %v369 = vunpack.c.l.s4 839922192
        %v370 = vunpack.c.0.s8 %v369
        %v371 = vlaneseq
        %v372 = vshrl.u32 %v371, 7
        %v373 = vsub.s32 %v370, %v372
        %v374 = vrot.slane %v366, %v373
        %v376 = vmul.f32 %v354, %v374
        %v377 = vld [vmem:[%s3] sm:$0xff]
        %v378 = vld [vmem:[%s329] sm:$0xff]
        %v379 = vld [vmem:[%s329 + $0x8] sm:$0xff]
        %v380 = vld [vmem:[%s4] sm:$0xff]
        %382 = vset.pattern.permute.xlu0 0
        %383 = vperm.xlu0 %382, %v380
        %v384 = vpop.permute.xlu0 %383
        %vm386 = vcmask 64512
        %v388 = vsel %vm386, %v377, 0
        %390 = vmatprep.subr.mxu0 %v379
        %391 = vmatpush1.msra.mxu0 %v378
        %392 = vmatprep.subr.mxu0 0.0
        %393 = vmatpush1.msra.mxu0 0.0
        %394 = vmatprep.subr.mxu0 0.0
        %395 = vmatpush1.msra.mxu0 0.0
        %396 = vmatprep.subr.mxu0 0.0
        %397 = vmatpush1.msra.mxu0 0.0
        %398 = vmatprep.subr.mxu0 0.0
        %399 = vmatpush1.msra.mxu0 0.0
        %400 = vmatprep.subr.mxu0 0.0
        %401 = vmatpush1.msra.mxu0 0.0
        %402 = vmatprep.subr.mxu0 0.0
        %403 = vmatpush1.msra.mxu0 0.0
        %404 = vmatprep.subr.mxu0 0.0
        %405 = vmatpush1.msra.mxu0 0.0
        %406 = vmatprep.subr.mxu0 0.0
        %407 = vmatpush1.msra.mxu0 0.0
        %408 = vmatprep.subr.mxu0 0.0
        %409 = vmatpush1.msra.mxu0 0.0
        %410 = vmatprep.subr.mxu0 0.0
        %411 = vmatpush1.msra.mxu0 0.0
        %412 = vmatprep.subr.mxu0 0.0
        %413 = vmatpush1.msra.mxu0 0.0
        %414 = vmatprep.subr.mxu0 0.0
        %415 = vmatpush1.msra.mxu0 0.0
        %416 = vmatprep.subr.mxu0 0.0
        %417 = vmatpush1.msra.mxu0 0.0
        %418 = vmatprep.subr.mxu0 0.0
        %419 = vmatpush1.msra.mxu0 0.0
        %420 = vmatprep.subr.mxu0 0.0
        %421 = vmatpush1.msra.mxu0 0.0
        %422 = vmatprep.subr.mxu0 0.0
        %423 = vmatpush1.msra.mxu0 0.0
        %424 = vmatprep.subr.mxu0 0.0
        %425 = vmatpush1.msra.mxu0 0.0
        %426 = vmatprep.subr.mxu0 0.0
        %427 = vmatpush1.msra.mxu0 0.0
        %428 = vmatprep.subr.mxu0 0.0
        %429 = vmatpush1.msra.mxu0 0.0
        %430 = vmatprep.subr.mxu0 0.0
        %431 = vmatpush1.msra.mxu0 0.0
        %432 = vmatprep.subr.mxu0 0.0
        %433 = vmatpush1.msra.mxu0 0.0
        %434 = vmatprep.subr.mxu0 0.0
        %435 = vmatpush1.msra.mxu0 0.0
        %436 = vmatprep.subr.mxu0 0.0
        %437 = vmatpush1.msra.mxu0 0.0
        %438 = vmatprep.subr.mxu0 0.0
        %439 = vmatpush1.msra.mxu0 0.0
        %440 = vmatprep.subr.mxu0 0.0
        %441 = vmatpush1.msra.mxu0 0.0
        %442 = vmatprep.subr.mxu0 0.0
        %443 = vmatpush1.msra.mxu0 0.0
        %444 = vmatprep.subr.mxu0 0.0
        %445 = vmatpush1.msra.mxu0 0.0
        %446 = vmatprep.subr.mxu0 0.0
        %447 = vmatpush1.msra.mxu0 0.0
        %448 = vmatprep.subr.mxu0 0.0
        %449 = vmatpush1.msra.mxu0 0.0
        %450 = vmatprep.subr.mxu0 0.0
        %451 = vmatpush1.msra.mxu0 0.0
        %452 = vmatprep.subr.mxu0 0.0
        %453 = vmatpush1.msra.mxu0 0.0
        %454 = vmatprep.mubr.f32.mxu0 0.0
        %455 = vmatmul.mubr.f32.gmra.mrb[0].mxu0 %v388
        %v456 = vpop.f32.mrb[0].mxu0
        %v457 = vadd.f32 %v384, %v456
        %v458 = vpop.f32.mrb[0].mxu0
        %v459 = vadd.f32 %v384, %v458
        %460 = vdwg.mxu0
        %v461 = vld [vmem:[%s333] sm:$0xff]
        %v463 = vcombine.high %v376, %v376
        %v465 = vmul.f32 %v457, %v376
        %v466 = vmul.f32 %v459, %v463
        %v469 = vrot.slane %v457, 4
        %v470 = vrot.slane %v459, 4
        %v473 = vadd.f32 %v465, %v469
        %v474 = vadd.f32 %v466, %v470
        %476 = vset.pattern.permute.xlu0 0
        %477 = vperm.xlu0 %476, %v461
        %v478 = vpop.permute.xlu0 %477
        %v480 = vmul.f32 %v478, %v376
        %v481 = vmul.f32 %v478, %v463
        %v482 = vrot.slane %v478, 4
        %v484 = vadd.f32 %v480, %v482
        %v485 = vadd.f32 %v481, %v482
        %v486 = vld [vmem:[%s5] sm:$0x1]
        %v487 = vld [vmem:[#allocation2] sm:$0x1]
        %489 = vset.pattern.permute.xlu0 0
        %490 = vperm.xlu0 %489, %v487
        %v491 = vpop.permute.xlu0 %490
        %v493 = vlaneseq
        %v494 = vshrl.u32 %v493, 7
        %v495 = vsub.s32 0, %v494
        %v496 = vrot.slane %v491, %v495
        %vm497 = vcmask 31744
        %v499 = vsel %vm497, %v486, 0
        %v501 = vsel %vm338, %v376, 0
        %v503 = vsel %vm338, %v463, 0
        %505 = vmatprep.subr.mxu0 %v503
        %506 = vmatpush1.msra.mxu0 %v501
        %507 = vmatprep.subr.mxu0 0.0
        %508 = vmatpush1.msra.mxu0 0.0
        %509 = vmatprep.subr.mxu0 0.0
        %510 = vmatpush1.msra.mxu0 0.0
        %511 = vmatprep.subr.mxu0 0.0
        %512 = vmatpush1.msra.mxu0 0.0
        %513 = vmatprep.subr.mxu0 0.0
        %514 = vmatpush1.msra.mxu0 0.0
        %515 = vmatprep.subr.mxu0 0.0
        %516 = vmatpush1.msra.mxu0 0.0
        %517 = vmatprep.subr.mxu0 0.0
        %518 = vmatpush1.msra.mxu0 0.0
        %519 = vmatprep.subr.mxu0 0.0
        %520 = vmatpush1.msra.mxu0 0.0
        %521 = vmatprep.subr.mxu0 0.0
        %522 = vmatpush1.msra.mxu0 0.0
        %523 = vmatprep.subr.mxu0 0.0
        %524 = vmatpush1.msra.mxu0 0.0
        %525 = vmatprep.subr.mxu0 0.0
        %526 = vmatpush1.msra.mxu0 0.0
        %527 = vmatprep.subr.mxu0 0.0
        %528 = vmatpush1.msra.mxu0 0.0
        %529 = vmatprep.subr.mxu0 0.0
        %530 = vmatpush1.msra.mxu0 0.0
        %531 = vmatprep.subr.mxu0 0.0
        %532 = vmatpush1.msra.mxu0 0.0
        %533 = vmatprep.subr.mxu0 0.0
        %534 = vmatpush1.msra.mxu0 0.0
        %535 = vmatprep.subr.mxu0 0.0
        %536 = vmatpush1.msra.mxu0 0.0
        %537 = vmatprep.subr.mxu0 0.0
        %538 = vmatpush1.msra.mxu0 0.0
        %539 = vmatprep.subr.mxu0 0.0
        %540 = vmatpush1.msra.mxu0 0.0
        %541 = vmatprep.subr.mxu0 0.0
        %542 = vmatpush1.msra.mxu0 0.0
        %543 = vmatprep.subr.mxu0 0.0
        %544 = vmatpush1.msra.mxu0 0.0
        %545 = vmatprep.subr.mxu0 0.0
        %546 = vmatpush1.msra.mxu0 0.0
        %547 = vmatprep.subr.mxu0 0.0
        %548 = vmatpush1.msra.mxu0 0.0
        %549 = vmatprep.subr.mxu0 0.0
        %550 = vmatpush1.msra.mxu0 0.0
        %551 = vmatprep.subr.mxu0 0.0
        %552 = vmatpush1.msra.mxu0 0.0
        %553 = vmatprep.subr.mxu0 0.0
        %554 = vmatpush1.msra.mxu0 0.0
        %555 = vmatprep.subr.mxu0 0.0
        %556 = vmatpush1.msra.mxu0 0.0
        %557 = vmatprep.subr.mxu0 0.0
        %558 = vmatpush1.msra.mxu0 0.0
        %559 = vmatprep.subr.mxu0 0.0
        %560 = vmatpush1.msra.mxu0 0.0
        %561 = vmatprep.subr.mxu0 0.0
        %562 = vmatpush1.msra.mxu0 0.0
        %563 = vmatprep.subr.mxu0 0.0
        %564 = vmatpush1.msra.mxu0 0.0
        %565 = vmatprep.subr.mxu0 0.0
        %566 = vmatpush1.msra.mxu0 0.0
        %567 = vmatprep.subr.mxu0 0.0
        %568 = vmatpush1.msra.mxu0 0.0
        %569 = vmatprep.mubr.f32.mxu0 0.0
        %570 = vmatmul.mubr.f32.gmra.mrb[0].mxu0 %v499
        %v571 = vpop.f32.mrb[0].mxu0
        %v572 = vadd.f32 %v496, %v571
        %v573 = vpop.f32.mrb[0].mxu0
        %v574 = vadd.f32 %v496, %v573
        %575 = vdwg.mxu0
        %v576 = vxor.u32 %v572, 2147483648
        %v577 = vxor.u32 %v574, 2147483648
        %v578 = vmul.f32 %v576, 1.442695
        %v579 = vpow.pop %v578
        %v580 = vmul.f32 %v577, 1.442695
        %v581 = vpow.pop %v580
        %v582 = vadd.f32 %v579, 1.0
        %v583 = vadd.f32 %v581, 1.0
        %v584 = vrcp.pop %v582
        %v585 = vmul.f32 1.0, %v584
        %v586 = vrcp.pop %v583
        %v587 = vmul.f32 1.0, %v586
        %v588 = vsub.f32 %v484, %v473
        %v589 = vsub.f32 %v485, %v474
        %v590 = vlaneseq
        %v591 = vshrl.u32 %v590, 7
        %v592 = vsub.s32 0, %v591
        %v593 = vrot.slane %v585, %v592
        %v594 = vlaneseq
        %v595 = vshrl.u32 %v594, 7
        %v596 = vsub.s32 0, %v595
        %v597 = vrot.slane %v587, %v596
        %v598 = vmul.f32 %v593, %v588
        %v599 = vmul.f32 %v597, %v589
        %v600 = vadd.f32 %v473, %v598
        %v601 = vadd.f32 %v474, %v599
        %v604 = vcombine.low %v600, %v601
        %606 = vst [vmem:[%s324] sm:$0xff] %v604
        %s607 = sand.u32 %s196, 1
        %s608 = scalar_lea.sflag [#allocation5], %s607
        %s609 = sand.u32 %s196, 1
        %s610 = smul.addr %s609, 8
        %s611 = scalar_lea.vmem [#allocation6], %s610
        // Predicated region
        $region53: #{tpu_custom_call.1} parent=47 // pred_check
          %p612 = pneg %p206
        $region54: #{tpu_custom_call.1} parent=47 // pred_check_branch
          %614 = sbr.rel (%p612) target = $region56
        $region55: #{tpu_custom_call.1} parent=47 // pred_region
          %s616 = ssub.s32 128, 128
          %617 = vsyncadd %s608, %s616
          %s618 = smul.addr %s26, 2
          %s619 = smul.addr %s618, 64
          %s620 = scalar_lea.hbm %s7, %s619
          %s622 = sshll.u32 %s611, 4
          %s623 = int_to_ptr.vmem [resolvable:$true] %s622
          %625 = dma.vmem_to_hbm [thread:$0]  %s623, 128, %s620, %s608
        $region56: #{tpu_custom_call.1} parent=47 // pred_fallthru
          _
      $region48: #{tpu_custom_call.1} parent=5 // pred_fallthru
        _
      %p626 = scmp.le.s32.totalorder 2, %s21
      // Predicated region
      $region57: #{tpu_custom_call.1} parent=5 // pred_check
        %p627 = pneg %p626
      $region58: #{tpu_custom_call.1} parent=5 // pred_check_branch
        %629 = sbr.rel (%p627) target = $region60
      $region59: #{tpu_custom_call.1} parent=5 // pred_region
        %s630 = ssub.s32 %s21, 2
        // Predicated region
        $region61: #{tpu_custom_call.1} parent=59 // pred_check
          %p631 = pneg %p212
        $region62: #{tpu_custom_call.1} parent=59 // pred_check_branch
          %633 = sbr.rel (%p631) target = $region64
        $region63: #{tpu_custom_call.1} parent=59 // pred_region
          %s634 = sand.u32 %s197, 1
          %s635 = scalar_lea.sflag [#allocation5], %s634
          %s636 = sand.u32 %s197, 1
          %s637 = smul.addr %s636, 8
          %s638 = scalar_lea.vmem [#allocation6], %s637
          %639 = dma.done %s635, 128
        $region64: #{tpu_custom_call.1} parent=59 // pred_fallthru
          _
      $region60: #{tpu_custom_call.1} parent=5 // pred_fallthru
        _
    $region6: #{tpu_custom_call.1} parent=1 // loop_footer
      %s25 = sadd.s32 1, %s21
    $region7: #{tpu_custom_call.1} parent=1 // loop_footer_branch
      %20 = sbr.rel target = $region3
    $region8: #{tpu_custom_call.1} parent=1 // loop_exit
      _
    %640 = vsyncpa [#allocation4], 1
    %s641 = scalar_lea.sflag [#allocation4], 1
    %642 = vsyncpa %s641, 1
    %643 = vsyncpa [#allocation5], 1
    %s644 = scalar_lea.sflag [#allocation5], 1
    %645 = vsyncpa %s644, 1

</llo_original>
